<compile_context>
chip_gen: v6e
topology: v6e:2x2x1
jax: 0.10.0
libtpu: 0.0.40
codegen_flags: <defaults>
</compile_context>

<pallas_src>
import numpy as np
import jax
import jax.numpy as jnp
from jax.experimental import pallas as pl
from jax.experimental.pallas import tpu as pltpu


def _round_up(v, m):
    return ((v + m - 1) // m) * m


def _vmem_capacity_bytes():
    """Best-effort VMEM capacity query; conservative (v7x-sized) fallback."""
    try:
        info = pltpu.get_tpu_info()
        v = getattr(info, "vmem_capacity_bytes", None)
        if v:
            return int(v)
    except Exception:
        pass
    return 64 * 1024 * 1024


def _make_kernel(tk, x_resident):
    """grid = (n_tiles, m_tiles, k_tiles); k (contraction) is innermost."""

    def kernel(l_ref, x_ref, o_ref, y_acc):
        k = pl.program_id(2)
        nk = pl.num_programs(2)

        if x_resident:
            # X block holds the full contraction extent; slice the k-th row band.
            row0 = pl.multiple_of(k * tk, tk)
            x_blk = x_ref[pl.ds(row0, tk), :]
        else:
            x_blk = x_ref[...]

        prod = jnp.dot(l_ref[...], x_blk, preferred_element_type=jnp.float32)

        # Direct write of the first partial product (no separate zeroing pass).
        @pl.when(k == 0)
        def _():
            y_acc[...] = prod

        @pl.when(k != 0)
        def _():
            y_acc[...] += prod

        # Rows [m*tm, (m+1)*tm) of Y are complete: emit their per-column sum of
        # squares as a lane-dense row (broadcast over the 8 sublanes of the
        # output tile; the wrapper reads sublane 0).
        @pl.when(k == nk - 1)
        def _():
            y = y_acc[...]
            s = jnp.sum(y * y, axis=0, keepdims=True)             # (1, tn)
            o_ref[...] = jnp.broadcast_to(s[None], o_ref.shape)   # (1, 8, tn)

    return kernel


def make_laplacian_loss(laplacian, *, average=False, block_mk=None,
                        use_bf16=False, _force_x_tiled=False):
    """Build a jitted loss(x) for a fixed Laplacian.

    The padded / cast L is prepared here exactly once (per-mesh constant),
    hoisting it out of the per-call hot path.
    """
    laplacian = jnp.asarray(laplacian, dtype=jnp.float32)
    NV = laplacian.shape[0]

    vmem_cap = _vmem_capacity_bytes()
    if block_mk is None:
        # 128 MiB VMEM (v5e/v6e) -> 2048; 64 MiB (v7x) -> 1024.
        block_mk = 2048 if vmem_cap >= 100 * 1024 * 1024 else 1024
    block_mk = max(128, _round_up(block_mk, 128))

    if NV <= block_mk:
        NVp = _round_up(NV, 8)
        tm = tk = NVp
    else:
        tm = tk = block_mk
        NVp = _round_up(NV, block_mk)

    io_dtype = jnp.bfloat16 if use_bf16 else jnp.float32
    io_bytes = 2 if use_bf16 else 4

    # Pad + cast L once (like the module's registered buffer).  Zero padding is
    # exact: padded rows/cols contribute 0 to Y and to the column sums.
    L = laplacian.astype(io_dtype)
    if NVp != NV:
        L = jnp.pad(L, ((0, NVp - NV), (0, NVp - NV)))

    @jax.jit
    def loss_fn(x):
        B, nv_in, C = x.shape
        assert nv_in == NV, (nv_in, NV)
        N = B * C

        # Lane tiling for the folded batch*coord axis: collapse to a single
        # tile whenever it fits; otherwise 512-wide lane tiles.
        Np128 = _round_up(N, 128)
        tn = Np128 if Np128 <= 1024 else 512
        Np = _round_up(N, tn)

        # Hold X fully VMEM-resident (read from HBM exactly once) when small.
        x_resident = (not _force_x_tiled) and (NVp * tn * io_bytes <= 8 * 1024 * 1024)

        # Fold batch+coord into the lane axis; zero-pad (exact).
        X = jnp.transpose(x.astype(io_dtype), (1, 0, 2)).reshape(NV, N)
        if (NVp != NV) or (Np != N):
            X = jnp.pad(X, ((0, NVp - NV), (0, Np - N)))

        n_tiles = Np // tn
        m_tiles = NVp // tm
        k_tiles = NVp // tk
        grid = (n_tiles, m_tiles, k_tiles)

        if x_resident:
            x_spec = pl.BlockSpec((NVp, tn), lambda n, m, k: (0, n))
            x_buf_bytes = 2 * NVp * tn * io_bytes
        else:
            x_spec = pl.BlockSpec((tk, tn), lambda n, m, k: (k, n))
            x_buf_bytes = 2 * tk * tn * io_bytes

        # VMEM budget: double-buffered L + X buffers + y_acc + output blocks.
        work = (2 * tm * tk * io_bytes + x_buf_bytes
                + tm * tn * 4 + 2 * 8 * tn * 4)
        vmem_limit = int(min(max(work + 8 * 1024 * 1024, 32 * 1024 * 1024),
                             int(vmem_cap * 0.85)))

        colsq = pl.pallas_call(
            _make_kernel(tk, x_resident),
            out_shape=jax.ShapeDtypeStruct((m_tiles, 8, Np), jnp.float32),
            grid_spec=pltpu.PrefetchScalarGridSpec(
                num_scalar_prefetch=0,
                grid=grid,
                in_specs=[
                    pl.BlockSpec((tm, tk), lambda n, m, k: (m, k)),  # L tile
                    x_spec,                                          # X
                ],
                out_specs=pl.BlockSpec((1, 8, tn), lambda n, m, k: (m, 0, n)),
                scratch_shapes=[pltpu.VMEM((tm, tn), jnp.float32)],  # Y row acc
            ),
            compiler_params=pltpu.CompilerParams(
                dimension_semantics=("parallel", "parallel", "arbitrary"),
                vmem_limit_bytes=vmem_limit,
            ),
        )(L, X)

        # Sum partial per-column sums over the m row tiles, then group C
        # adjacent columns per batch element.
        col = jnp.sum(colsq[:, 0, :], axis=0)          # (Np,)
        loss = col[:N].reshape(B, C).sum(axis=1)       # (B,)
        if average:
            return jnp.sum(loss) / B
        return loss

    return loss_fn


def laplacian_loss_pallas(laplacian, x, average=False, **kwargs):
    """One-shot convenience wrapper (prefer make_laplacian_loss to hoist L prep)."""
    return make_laplacian_loss(laplacian, average=average, **kwargs)(x)


def build_laplacian(nv, faces):
    """Deterministic normalized graph Laplacian (numpy), matching the PyTorch
    module's __init__ exactly."""
    lap = np.zeros([nv, nv], dtype=np.float32)
    lap[faces[:, 0], faces[:, 1]] = -1
    lap[faces[:, 1], faces[:, 0]] = -1
    lap[faces[:, 1], faces[:, 2]] = -1
    lap[faces[:, 2], faces[:, 1]] = -1
    lap[faces[:, 2], faces[:, 0]] = -1
    lap[faces[:, 0], faces[:, 2]] = -1
    r, c = np.diag_indices(nv)
    lap[r, c] = -lap.sum(1)
    for i in range(nv):
        lap[i, :] /= lap[i, i]
    return lap


if __name__ == "__main__":
    def run_case(B, NV, C, key, *, block_mk=None, use_bf16=False,
                 force_x_tiled=False, rtol=1e-3, atol=1e-3):
        # Triangle-strip faces so every vertex has nonzero degree (valid diag).
        faces = np.stack([np.arange(NV - 2),
                          np.arange(1, NV - 1),
                          np.arange(2, NV)], axis=1).astype(np.int32)
        lap = jnp.asarray(build_laplacian(NV, faces))
        x = jax.random.normal(key, (B, NV, C), dtype=jnp.float32)

        loss_fn = make_laplacian_loss(lap, average=False, block_mk=block_mk,
                                      use_bf16=use_bf16,
                                      _force_x_tiled=force_x_tiled)
        loss = jax.block_until_ready(loss_fn(x))

        # Pure-JAX reference.
        y_ref = jnp.einsum('vw,bwc->bvc', lap, x,
                           precision=jax.lax.Precision.HIGHEST)
        loss_ref = jnp.sum(y_ref ** 2, axis=(1, 2))
        assert jnp.allclose(loss, loss_ref, rtol=rtol, atol=atol), (loss, loss_ref)

        loss_avg_fn = make_laplacian_loss(lap, average=True, block_mk=block_mk,
                                          use_bf16=use_bf16,
                                          _force_x_tiled=force_x_tiled)
        loss_avg = jax.block_until_ready(loss_avg_fn(x))
        assert jnp.allclose(loss_avg, jnp.sum(loss_ref) / B, rtol=rtol, atol=atol)

    key = jax.random.PRNGKey(0)
    k1, k2, k3, k4 = jax.random.split(key, 4)

    # Small mesh, generation-aware default tile: single (NV, NV) L tile,
    # VMEM-resident X, grid (1, 1, 1).
    run_case(B=2, NV=64, C=3, key=k1)
    # Tiled case: NV padded 320 -> 384, 3x3 (m, k) L tiles, resident X sliced
    # with pl.ds inside the kernel, multi-row (parallel-m) output.
    run_case(B=4, NV=320, C=3, key=k2, block_mk=128)
    # Fallback path: X streamed as (tk, tn) tiles instead of held resident.
    run_case(B=4, NV=320, C=3, key=k3, block_mk=128, force_x_tiled=True)
    # Optional bf16 streaming of L/X (f32 MXU accumulation), looser tolerance.
    run_case(B=2, NV=256, C=3, key=k4, use_bf16=True, rtol=5e-2, atol=1e-1)

    print("KERNEL_OK")
</pallas_src>

<mosaic_0001>
module attributes {stable_mosaic.version = 11 : i64} {
  func.func @kernel(%arg0: i32, %arg1: i32, %arg2: i32, %arg3: memref<64x64xf32, #tpu.memory_space<vmem>>, %arg4: memref<64x128xf32, #tpu.memory_space<vmem>>, %arg5: memref<1x8x128xf32, #tpu.memory_space<vmem>>, %arg6: memref<64x128xf32, #tpu.memory_space<vmem>>) attributes {dimension_semantics = [#tpu.dimension_semantics<parallel>, #tpu.dimension_semantics<parallel>, #tpu.dimension_semantics<arbitrary>], iteration_bounds = array<i64: 1, 1, 1>, scalar_prefetch = 0 : i64, scratch_operands = 1 : i64, tpu.core_type = #tpu.core_type<tc>, window_params = [{transform_indices = @transform_0, window_bounds = array<i64: 64, 64>}, {transform_indices = @transform_1, window_bounds = array<i64: 64, 128>}, {transform_indices = @transform_2, window_bounds = array<i64: 1, 8, 128>}]} {
    %c64_i32 = arith.constant 64 : i32
    %0 = arith.muli %arg2, %c64_i32 : i32
    %1 = tpu.assume_multiple %0, 64 : i32
    %2 = arith.index_cast %1 : i32 to index
    %c0 = arith.constant 0 : index
    %3 = vector.load %arg4[%2, %c0] : memref<64x128xf32, #tpu.memory_space<vmem>>, vector<64x128xf32>
    %c0_0 = arith.constant 0 : index
    %c0_1 = arith.constant 0 : index
    %4 = vector.load %arg3[%c0_0, %c0_1] : memref<64x64xf32, #tpu.memory_space<vmem>>, vector<64x64xf32>
    %cst = arith.constant dense<0.000000e+00> : vector<64x128xf32>
    %5 = tpu.matmul %4, %3, %cst {dimension_numbers = #tpu.dot_dimension_numbers<[1], [0], [0], [1], [0, 0, 1, 1], [], []>} : vector<64x64xf32>, vector<64x128xf32>, vector<64x128xf32> -> vector<64x128xf32>
    %c0_i32 = arith.constant 0 : i32
    %6 = arith.cmpi eq, %arg2, %c0_i32 : i32
    %7 = arith.extui %6 : i1 to i32
    %c0_i32_2 = arith.constant 0 : i32
    %8 = arith.cmpi ne, %7, %c0_i32_2 : i32
    scf.if %8 {
      %c0_7 = arith.constant 0 : index
      %c0_8 = arith.constant 0 : index
      %15 = vector.load %arg6[%c0_7, %c0_8] : memref<64x128xf32, #tpu.memory_space<vmem>>, vector<64x128xf32>
      tpu.vector_store %arg6[%c0_7, %c0_8], %5 {strides = array<i32>} : memref<64x128xf32, #tpu.memory_space<vmem>>, vector<64x128xf32>,
    } else {
    }
    %c0_i32_3 = arith.constant 0 : i32
    %9 = arith.cmpi ne, %arg2, %c0_i32_3 : i32
    %10 = arith.extui %9 : i1 to i32
    %c0_i32_4 = arith.constant 0 : i32
    %11 = arith.cmpi ne, %10, %c0_i32_4 : i32
    scf.if %11 {
      %c0_7 = arith.constant 0 : index
      %c0_8 = arith.constant 0 : index
      %15 = vector.load %arg6[%c0_7, %c0_8] : memref<64x128xf32, #tpu.memory_space<vmem>>, vector<64x128xf32>
      %16 = arith.addf %15, %5 : vector<64x128xf32>
      %c0_9 = arith.constant 0 : index
      %c0_10 = arith.constant 0 : index
      %17 = vector.load %arg6[%c0_9, %c0_10] : memref<64x128xf32, #tpu.memory_space<vmem>>, vector<64x128xf32>
      tpu.vector_store %arg6[%c0_9, %c0_10], %16 {strides = array<i32>} : memref<64x128xf32, #tpu.memory_space<vmem>>, vector<64x128xf32>,
    } else {
    }
    %c0_i32_5 = arith.constant 0 : i32
    %12 = arith.cmpi eq, %arg2, %c0_i32_5 : i32
    %13 = arith.extui %12 : i1 to i32
    %c0_i32_6 = arith.constant 0 : i32
    %14 = arith.cmpi ne, %13, %c0_i32_6 : i32
    scf.if %14 {
      %c0_7 = arith.constant 0 : index
      %c0_8 = arith.constant 0 : index
      %15 = vector.load %arg6[%c0_7, %c0_8] : memref<64x128xf32, #tpu.memory_space<vmem>>, vector<64x128xf32>
      %16 = arith.mulf %15, %15 : vector<64x128xf32>
      %cst_9 = arith.constant dense<0.000000e+00> : vector<128xf32>
      %17 = vector.multi_reduction <add>, %16, %cst_9 [0] : vector<64x128xf32> to vector<128xf32>
      %18 = vector.shape_cast %17 : vector<128xf32> to vector<1x128xf32>
      %19 = vector.shape_cast %18 : vector<1x128xf32> to vector<1x1x128xf32>
      %20 = vector.shape_cast %19 : vector<1x1x128xf32> to vector<1x1x128xf32>
      %21 = vector.broadcast %20 : vector<1x1x128xf32> to vector<1x8x128xf32>
      %c0_10 = arith.constant 0 : index
      %c0_11 = arith.constant 0 : index
      %c0_12 = arith.constant 0 : index
      %22 = vector.load %arg5[%c0_10, %c0_11, %c0_12] : memref<1x8x128xf32, #tpu.memory_space<vmem>>, vector<1x8x128xf32>
      tpu.vector_store %arg5[%c0_10, %c0_11, %c0_12], %21 {strides = array<i32>} : memref<1x8x128xf32, #tpu.memory_space<vmem>>, vector<1x8x128xf32>,
    } else {
    }
    return
  }
  func.func @transform_0(%arg0: i32, %arg1: i32, %arg2: i32) -> (i32, i32) {
    %c0_i32 = arith.constant 0 : i32
    return %arg1, %arg2 : i32, i32
  }
  func.func @transform_1(%arg0: i32, %arg1: i32, %arg2: i32) -> (i32, i32) {
    %c0_i32 = arith.constant 0 : i32
    %c0_i32_0 = arith.constant 0 : i32
    return %c0_i32, %arg0 : i32, i32
  }
  func.func @transform_2(%arg0: i32, %arg1: i32, %arg2: i32) -> (i32, i32, i32) {
    %c0_i32 = arith.constant 0 : i32
    %c0_i32_0 = arith.constant 0 : i32
    return %arg1, %c0_i32, %arg0 : i32, i32, i32
  }
}

</mosaic_0001>

<llo_original>
// kernel: loss_fn.1
$region0: #{loss_fn.1}
  #allocation0 [shape = 'u32[]', space=smem, size = 0x4, offset = 0x4, fixed_abs, tag = 'smem constant byte address 0x4 - core index']
  #allocation1 [shape = 'u32[144,128]{1,0:T(1,128)}', space=vmem, size = 0x12000, scoped, tag = 'internal scratch']
  #allocation2 [shape = 'f32[64,128]{1,0:T(8,128)}', space=vmem, size = 0x8000, scoped, tag = 'scratch operand']
  %s0 = inlined_call_operand.vmem [shape: f32[64,64], index: 0, kind: input, shape index: {}]
  %s1 = inlined_call_operand.vmem [shape: f32[64,128], index: 1, kind: input, shape index: {}]
  %s2 = inlined_call_operand.vmem [shape: f32[1,8,128], index: 2, kind: output, shape index: {}]
  %s3 = sld [smem:[#allocation0]]
  $region30: #{loss_fn.1} parent=0
    _
  %s5 = ssub.s32 1, %s3
  %s6 = scalar_select 0, %s5, %s3
  // Predicated region
  $region2: #{loss_fn.1} parent=0 // pred_check
    _
  $region3: #{loss_fn.1} parent=0 // pred_check_branch
    %8 = sbr.rel (0) target = $region5
  $region4: #{loss_fn.1} parent=0 // pred_region
    _
  $region5: #{loss_fn.1} parent=0 // pred_fallthru
    _
  // Predicated region
  $region6: #{loss_fn.1} parent=0 // pred_check
    _
  $region7: #{loss_fn.1} parent=0 // pred_check_branch
    %10 = sbr.rel (0) target = $region9
  $region8: #{loss_fn.1} parent=0 // pred_region
    _
  $region9: #{loss_fn.1} parent=0 // pred_fallthru
    _
  %s11 = smul.u32 0, 64
  %s12 = scalar_lea.vmem %s1, %s11
  %v13 = vld [vmem:[%s12] sm:$0xff]
  %v14 = vld [vmem:[%s12 + $0x8] sm:$0xff]
  %v15 = vld [vmem:[%s12 + $0x10] sm:$0xff]
  %v16 = vld [vmem:[%s12 + $0x18] sm:$0xff]
  %v17 = vld [vmem:[%s12 + $0x20] sm:$0xff]
  %v18 = vld [vmem:[%s12 + $0x28] sm:$0xff]
  %v19 = vld [vmem:[%s12 + $0x30] sm:$0xff]
  %v20 = vld [vmem:[%s12 + $0x38] sm:$0xff]
  %v21 = vld [vmem:[%s0] sm:$0xff]
  %v22 = vld [vmem:[%s0 + $0x8] sm:$0xff]
  %v23 = vld [vmem:[%s0 + $0x10] sm:$0xff]
  %v24 = vld [vmem:[%s0 + $0x18] sm:$0xff]
  %v25 = vld [vmem:[%s0 + $0x20] sm:$0xff]
  %v26 = vld [vmem:[%s0 + $0x28] sm:$0xff]
  %v27 = vld [vmem:[%s0 + $0x30] sm:$0xff]
  %v28 = vld [vmem:[%s0 + $0x38] sm:$0xff]
  %vm29 = vcmask 523264
  %v31 = vsel %vm29, %v21, 0
  %v34 = vsel %vm29, %v22, 0
  %v37 = vsel %vm29, %v23, 0
  %v40 = vsel %vm29, %v24, 0
  %v43 = vsel %vm29, %v25, 0
  %v46 = vsel %vm29, %v26, 0
  %v49 = vsel %vm29, %v27, 0
  %v52 = vsel %vm29, %v28, 0
  %54 = vmatprep.subr.mxu0 0.0
  %55 = vmatpush1.msra.mxu0 0.0
  %56 = vmatprep.subr.mxu0 0.0
  %57 = vmatpush1.msra.mxu0 0.0
  %58 = vmatprep.subr.mxu0 0.0
  %59 = vmatpush1.msra.mxu0 0.0
  %60 = vmatprep.subr.mxu0 0.0
  %61 = vmatpush1.msra.mxu0 0.0
  %62 = vmatprep.subr.mxu0 0.0
  %63 = vmatpush1.msra.mxu0 0.0
  %64 = vmatprep.subr.mxu0 0.0
  %65 = vmatpush1.msra.mxu0 0.0
  %66 = vmatprep.subr.mxu0 0.0
  %67 = vmatpush1.msra.mxu0 0.0
  %68 = vmatprep.subr.mxu0 0.0
  %69 = vmatpush1.msra.mxu0 0.0
  %70 = vmatprep.subr.mxu0 0.0
  %71 = vmatpush1.msra.mxu0 %v20
  %72 = vmatprep.subr.mxu0 0.0
  %73 = vmatpush1.msra.mxu0 %v19
  %74 = vmatprep.subr.mxu0 0.0
  %75 = vmatpush1.msra.mxu0 %v18
  %76 = vmatprep.subr.mxu0 0.0
  %77 = vmatpush1.msra.mxu0 %v17
  %78 = vmatprep.subr.mxu0 0.0
  %79 = vmatpush1.msra.mxu0 %v16
  %80 = vmatprep.subr.mxu0 0.0
  %81 = vmatpush1.msra.mxu0 %v15
  %82 = vmatprep.subr.mxu0 0.0
  %83 = vmatpush1.msra.mxu0 %v14
  %84 = vmatprep.subr.mxu0 0.0
  %85 = vmatpush1.msra.mxu0 %v13
  %86 = vmatprep.subr.mxu0 0.0
  %87 = vmatpush2.msra.mxu0 0.0
  %88 = vmatprep.subr.mxu0 0.0
  %89 = vmatpush2.msra.mxu0 0.0
  %90 = vmatprep.subr.mxu0 0.0
  %91 = vmatpush2.msra.mxu0 0.0
  %92 = vmatprep.subr.mxu0 0.0
  %93 = vmatpush2.msra.mxu0 0.0
  %94 = vmatprep.subr.mxu0 0.0
  %95 = vmatpush2.msra.mxu0 0.0
  %96 = vmatprep.subr.mxu0 0.0
  %97 = vmatpush2.msra.mxu0 0.0
  %98 = vmatprep.subr.mxu0 0.0
  %99 = vmatpush2.msra.mxu0 0.0
  %100 = vmatprep.subr.mxu0 0.0
  %101 = vmatpush2.msra.mxu0 0.0
  %102 = vmatprep.subr.mxu0 0.0
  %103 = vmatpush2.msra.mxu0 0.0
  %104 = vmatprep.subr.mxu0 0.0
  %105 = vmatpush2.msra.mxu0 0.0
  %106 = vmatprep.subr.mxu0 0.0
  %107 = vmatpush2.msra.mxu0 0.0
  %108 = vmatprep.subr.mxu0 0.0
  %109 = vmatpush2.msra.mxu0 0.0
  %110 = vmatprep.subr.mxu0 0.0
  %111 = vmatpush2.msra.mxu0 0.0
  %112 = vmatprep.subr.mxu0 0.0
  %113 = vmatpush2.msra.mxu0 0.0
  %114 = vmatprep.subr.mxu0 0.0
  %115 = vmatpush2.msra.mxu0 0.0
  %116 = vmatprep.subr.mxu0 0.0
  %117 = vmatpush2.msra.mxu0 0.0
  %118 = vmatprep.mubr.f32.mxu0 0.0
  %119 = vmatmul.mubr.f32.gmra.mxu0 %v31
  %v120 = vpop.f32.mrf.mxu0
  %v121 = vadd.f32 0.0, %v120
  %v122 = vpop.f32.mrf.mxu0
  %123 = vmatprep.mubr.f32.mxu0 0.0
  %124 = vmatmul.mubr.f32.gmra.mxu0 %v34
  %v125 = vpop.f32.mrf.mxu0
  %v126 = vadd.f32 0.0, %v125
  %v127 = vpop.f32.mrf.mxu0
  %128 = vmatprep.mubr.f32.mxu0 0.0
  %129 = vmatmul.mubr.f32.gmra.mxu0 %v37
  %v130 = vpop.f32.mrf.mxu0
  %v131 = vadd.f32 0.0, %v130
  %v132 = vpop.f32.mrf.mxu0
  %133 = vmatprep.mubr.f32.mxu0 0.0
  %134 = vmatmul.mubr.f32.gmra.mxu0 %v40
  %v135 = vpop.f32.mrf.mxu0
  %v136 = vadd.f32 0.0, %v135
  %v137 = vpop.f32.mrf.mxu0
  %138 = vmatprep.mubr.f32.mxu0 0.0
  %139 = vmatmul.mubr.f32.gmra.mxu0 %v43
  %v140 = vpop.f32.mrf.mxu0
  %v141 = vadd.f32 0.0, %v140
  %v142 = vpop.f32.mrf.mxu0
  %143 = vmatprep.mubr.f32.mxu0 0.0
  %144 = vmatmul.mubr.f32.gmra.mxu0 %v46
  %v145 = vpop.f32.mrf.mxu0
  %v146 = vadd.f32 0.0, %v145
  %v147 = vpop.f32.mrf.mxu0
  %148 = vmatprep.mubr.f32.mxu0 0.0
  %149 = vmatmul.mubr.f32.gmra.mxu0 %v49
  %v150 = vpop.f32.mrf.mxu0
  %v151 = vadd.f32 0.0, %v150
  %v152 = vpop.f32.mrf.mxu0
  %153 = vmatprep.mubr.f32.mxu0 0.0
  %154 = vmatmul.mubr.f32.gmra.mxu0 %v52
  %v155 = vpop.f32.mrf.mxu0
  %v156 = vadd.f32 0.0, %v155
  %v157 = vpop.f32.mrf.mxu0
  %158 = vdwg.mxu0
  %p159 = scmp.eq.s32.totalorder 0, 0
  // Predicated region
  $region10: #{loss_fn.1} parent=0 // pred_check
    %p160 = pneg %p159
  $region11: #{loss_fn.1} parent=0 // pred_check_branch
    %162 = sbr.rel (%p160) target = $region13
  $region12: #{loss_fn.1} parent=0 // pred_region
    %163 = vst [vmem:[#allocation2] sm:$0xff] %v121
    %164 = vst [vmem:[#allocation2 + $0x8] sm:$0xff] %v126
    %165 = vst [vmem:[#allocation2 + $0x10] sm:$0xff] %v131
    %166 = vst [vmem:[#allocation2 + $0x18] sm:$0xff] %v136
    %167 = vst [vmem:[#allocation2 + $0x20] sm:$0xff] %v141
    %168 = vst [vmem:[#allocation2 + $0x28] sm:$0xff] %v146
    %169 = vst [vmem:[#allocation2 + $0x30] sm:$0xff] %v151
    %170 = vst [vmem:[#allocation2 + $0x38] sm:$0xff] %v156
  $region13: #{loss_fn.1} parent=0 // pred_fallthru
    _
  %p171 = scmp.ne.s32.totalorder 0, 0
  // Predicated region
  $region14: #{loss_fn.1} parent=0 // pred_check
    %p172 = pneg %p171
  $region15: #{loss_fn.1} parent=0 // pred_check_branch
    %174 = sbr.rel (%p172) target = $region17
  $region16: #{loss_fn.1} parent=0 // pred_region
    %v175 = vld [vmem:[#allocation2] sm:$0xff]
    %v176 = vld [vmem:[#allocation2 + $0x8] sm:$0xff]
    %v177 = vld [vmem:[#allocation2 + $0x10] sm:$0xff]
    %v178 = vld [vmem:[#allocation2 + $0x18] sm:$0xff]
    %v179 = vld [vmem:[#allocation2 + $0x20] sm:$0xff]
    %v180 = vld [vmem:[#allocation2 + $0x28] sm:$0xff]
    %v181 = vld [vmem:[#allocation2 + $0x30] sm:$0xff]
    %v182 = vld [vmem:[#allocation2 + $0x38] sm:$0xff]
    %v183 = vadd.f32 %v175, %v121
    %v184 = vadd.f32 %v176, %v126
    %v185 = vadd.f32 %v177, %v131
    %v186 = vadd.f32 %v178, %v136
    %v187 = vadd.f32 %v179, %v141
    %v188 = vadd.f32 %v180, %v146
    %v189 = vadd.f32 %v181, %v151
    %v190 = vadd.f32 %v182, %v156
    %191 = vst [vmem:[#allocation2] sm:$0xff] %v183
    %192 = vst [vmem:[#allocation2 + $0x8] sm:$0xff] %v184
    %193 = vst [vmem:[#allocation2 + $0x10] sm:$0xff] %v185
    %194 = vst [vmem:[#allocation2 + $0x18] sm:$0xff] %v186
    %195 = vst [vmem:[#allocation2 + $0x20] sm:$0xff] %v187
    %196 = vst [vmem:[#allocation2 + $0x28] sm:$0xff] %v188
    %197 = vst [vmem:[#allocation2 + $0x30] sm:$0xff] %v189
    %198 = vst [vmem:[#allocation2 + $0x38] sm:$0xff] %v190
  $region17: #{loss_fn.1} parent=0 // pred_fallthru
    _
  // Predicated region
  $region18: #{loss_fn.1} parent=0 // pred_check
    %p199 = pneg %p159
  $region19: #{loss_fn.1} parent=0 // pred_check_branch
    %201 = sbr.rel (%p199) target = $region21
  $region20: #{loss_fn.1} parent=0 // pred_region
    %v202 = vld [vmem:[#allocation2] sm:$0xff]
    %v203 = vld [vmem:[#allocation2 + $0x8] sm:$0xff]
    %v204 = vld [vmem:[#allocation2 + $0x10] sm:$0xff]
    %v205 = vld [vmem:[#allocation2 + $0x18] sm:$0xff]
    %v206 = vld [vmem:[#allocation2 + $0x20] sm:$0xff]
    %v207 = vld [vmem:[#allocation2 + $0x28] sm:$0xff]
    %v208 = vld [vmem:[#allocation2 + $0x30] sm:$0xff]
    %v209 = vld [vmem:[#allocation2 + $0x38] sm:$0xff]
    %v210 = vmul.f32 %v202, %v202
    %v211 = vmul.f32 %v203, %v203
    %v212 = vmul.f32 %v204, %v204
    %v213 = vmul.f32 %v205, %v205
    %v214 = vmul.f32 %v206, %v206
    %v215 = vmul.f32 %v207, %v207
    %v216 = vmul.f32 %v208, %v208
    %v217 = vmul.f32 %v209, %v209
    %v218 = vadd.f32 %v210, %v211
    %v219 = vadd.f32 %v218, %v212
    %v220 = vadd.f32 %v219, %v213
    %v221 = vadd.f32 %v220, %v214
    %v222 = vadd.f32 %v221, %v215
    %v223 = vadd.f32 %v222, %v216
    %v224 = vadd.f32 %v223, %v217
    %v225 = vrot.slane %v224, 4
    %v226 = vadd.f32 %v224, %v225
    %v227 = vrot.slane %v226, 2
    %v228 = vadd.f32 %v226, %v227
    %v229 = vrot.slane %v228, 1
    %v230 = vadd.f32 %v228, %v229
    %231 = vst [vmem:[%s2] sm:$0xff] %v230
  $region21: #{loss_fn.1} parent=0 // pred_fallthru
    _
  // Predicated region
  $region22: #{loss_fn.1} parent=0 // pred_check
    _
  $region23: #{loss_fn.1} parent=0 // pred_check_branch
    %233 = sbr.rel (0) target = $region25
  $region24: #{loss_fn.1} parent=0 // pred_region
    _
  $region25: #{loss_fn.1} parent=0 // pred_fallthru
    _
  // Predicated region
  $region26: #{loss_fn.1} parent=0 // pred_check
    _
  $region27: #{loss_fn.1} parent=0 // pred_check_branch
    %235 = sbr.rel (0) target = $region29
  $region28: #{loss_fn.1} parent=0 // pred_region
    _
  $region29: #{loss_fn.1} parent=0 // pred_fallthru
    _

</llo_original>
